<compile_context>
chip_gen: v6e
topology: v6e:2x2x1
jax: 0.10.0
libtpu: 0.0.40
codegen_flags: <defaults>
</compile_context>

<pallas_src>
import jax
import jax.numpy as jnp
from jax import lax
from jax.experimental import pallas as pl
from jax.experimental.pallas import tpu as pltpu

# Deterministic "parameters" of the synthetic transform chain.
GAIN = 0.8       # Gain transform
DC_OFFSET = 0.1  # DC-offset transform
P_APPLY = 0.5    # RandomApplys(p=0.5)

_SMALL_BYTES = 512 * 1024               # below this: single VMEM block, no grid
_MIN_GRID_BLOCKS = 8                    # >= 4 grid steps per TC on v7x megacore
_VMEM_LIMIT_BYTES = 48 * 1024 * 1024    # < 64 MiB physical VMEM on v7x


def _round_up(x, m):
    return ((x + m - 1) // m) * m


def _block_byte_target():
    """Per-generation block-size target (bytes) for the tiled path."""
    try:
        info = pltpu.get_tpu_info()
        vmem = getattr(info, "vmem_capacity_bytes", None)
    except Exception:  # interpret mode / non-TPU tracing: conservative default
        vmem = None
    if vmem is not None and vmem <= 80 * 1024 * 1024:
        # v7x-class core (64 MiB VMEM, ~3.2 TB/s HBM): big blocks, otherwise
        # the ~0.35us fixed per-step overhead is ~20% of a block's DMA time.
        return 8 * 1024 * 1024
    # v5e / v6e (128 MiB VMEM): 6 MiB x 4 pipeline buffers = 24 MiB, well
    # inside the explicit vmem_limit_bytes set on the tiled pallas_call.
    return 6 * 1024 * 1024


def _chain_kernel(x_ref, o_ref):
    # Fused chain  Gain -> PolarityInversion -> DC offset:
    #   ((x * GAIN) * -1) + DC_OFFSET  ==  DC_OFFSET - GAIN * x
    o_ref[...] = DC_OFFSET - GAIN * x_ref[...]


def _apply_chain(audio):
    """Run the fused transform chain over the whole (B, T) array."""
    B, T = audio.shape
    itemsize = audio.dtype.itemsize
    total_bytes = B * T * itemsize

    if total_bytes <= _SMALL_BYTES:
        # Genuinely small input: single whole-array VMEM block, no grid /
        # pipelining machinery.
        return pl.pallas_call(
            _chain_kernel,
            out_shape=jax.ShapeDtypeStruct((B, T), audio.dtype),
            in_specs=[pl.BlockSpec(memory_space=pltpu.MemorySpace.VMEM)],
            out_specs=pl.BlockSpec(memory_space=pltpu.MemorySpace.VMEM),
        )(audio)

    # ---- Tiled, pipelined path -------------------------------------------
    target = _block_byte_target()
    # Enough blocks to (a) keep each block near the byte target and (b) give
    # both v7x TensorCores several steps each for DMA/compute overlap.
    desired_blocks = max(_MIN_GRID_BLOCKS, pl.cdiv(total_bytes, target))

    # Prefer splitting rows (keeps full-T, lane-dense blocks)...
    row_stripes = pl.cdiv(B, 8)
    row_blocks = min(desired_blocks, row_stripes)
    block_rows = _round_up(pl.cdiv(B, row_blocks), 8)
    if block_rows >= B:
        block_rows = B  # full dim: always a legal block size

    # ...and split the sample axis only when rows alone aren't enough
    # (long clips / small batch).  Column blocks are multiples of 128 so
    # stores stay unmasked except for the final tail block.
    col_splits = pl.cdiv(desired_blocks, max(row_blocks, 1))
    if col_splits <= 1 or T <= 128:
        block_cols = T
    else:
        block_cols = _round_up(pl.cdiv(T, col_splits), 128)
        if block_cols >= T:
            block_cols = T

    grid = (pl.cdiv(B, block_rows), pl.cdiv(T, block_cols))

    return pl.pallas_call(
        _chain_kernel,
        out_shape=jax.ShapeDtypeStruct((B, T), audio.dtype),
        grid_spec=pltpu.PrefetchScalarGridSpec(
            num_scalar_prefetch=0,
            grid=grid,
            in_specs=[pl.BlockSpec((block_rows, block_cols),
                                   lambda i, j: (i, j))],
            out_specs=pl.BlockSpec((block_rows, block_cols),
                                   lambda i, j: (i, j)),
        ),
        compiler_params=pltpu.CompilerParams(
            dimension_semantics=("parallel", "parallel"),
            vmem_limit_bytes=_VMEM_LIMIT_BYTES,
        ),
    )(audio)


def random_applys(audio, key, p=P_APPLY):
    """RandomApplys forward.

    torch: `if p < torch.rand(1): return audio`  ->  apply iff u <= p.
    The gate is one scalar uniform draw, so it lives in the wrapper as a
    lax.cond: the identity branch performs no HBM traffic at all.
    """
    u = jax.random.uniform(key, ())
    return lax.cond(u <= p, _apply_chain, lambda a: a, audio)


def _reference(audio, key, p=P_APPLY):
    u = jax.random.uniform(key, ())
    chained = DC_OFFSET - GAIN * audio  # -(audio * GAIN) + DC_OFFSET
    return jnp.where(u <= p, chained, audio)


if __name__ == "__main__":
    key = jax.random.PRNGKey(0)
    k_data, k_gate_a, k_gate_b = jax.random.split(key, 3)

    jitted = jax.jit(random_applys)

    # Small audio batch: 8 clips of 1024 samples (single-block, no-grid path).
    B, T = 8, 1024
    audio = jax.random.normal(k_data, (B, T), dtype=jnp.float32)
    for k_gate in (k_gate_a, k_gate_b):  # two keys -> exercises both gate branches
        out = jax.block_until_ready(jitted(audio, k_gate))
        ref = _reference(audio, k_gate)
        assert out.shape == audio.shape and out.dtype == audio.dtype
        assert jnp.allclose(out, ref, atol=1e-6, rtol=1e-6), "mismatch (small)"

    # Mid-size batch: exercises the tiled 2-D parallel-grid path (>= 8 blocks).
    B2, T2 = 128, 4096
    audio2 = jax.random.normal(k_data, (B2, T2), dtype=jnp.float32)
    out2 = jax.block_until_ready(jitted(audio2, k_gate_a))
    assert jnp.allclose(out2, _reference(audio2, k_gate_a),
                        atol=1e-6, rtol=1e-6), "mismatch (tiled)"

    # Odd sample count (T not a multiple of 128): masked-tail tiled path.
    B3, T3 = 64, 3000
    audio3 = jax.random.normal(k_data, (B3, T3), dtype=jnp.float32)
    out3 = jax.block_until_ready(jitted(audio3, k_gate_b))
    assert jnp.allclose(out3, _reference(audio3, k_gate_b),
                        atol=1e-6, rtol=1e-6), "mismatch (odd T)"

    # TODO(synk): RandomApplys wraps arbitrary user transforms; only a fixed
    # Gain -> PolarityInversion -> DC-offset chain is fused here.
    print("KERNEL_OK")
</pallas_src>

<mosaic_0001>
module attributes {stable_mosaic.version = 11 : i64} {
  func.func @_chain_kernel(%arg0: memref<8x1024xf32, #tpu.memory_space<vmem>>, %arg1: memref<8x1024xf32, #tpu.memory_space<vmem>>) attributes {dimension_semantics = [], scalar_prefetch = 0 : i64, scratch_operands = 0 : i64, tpu.core_type = #tpu.core_type<tc>} {
    %c0 = arith.constant 0 : index
    %c0_0 = arith.constant 0 : index
    %0 = vector.load %arg0[%c0, %c0_0] : memref<8x1024xf32, #tpu.memory_space<vmem>>, vector<8x1024xf32>
    %cst = arith.constant 8.000000e-01 : f32
    %1 = vector.broadcast %cst : f32 to vector<8x1024xf32>
    %2 = arith.mulf %1, %0 : vector<8x1024xf32>
    %cst_1 = arith.constant 1.000000e-01 : f32
    %3 = vector.broadcast %cst_1 : f32 to vector<8x1024xf32>
    %4 = arith.subf %3, %2 : vector<8x1024xf32>
    %c0_2 = arith.constant 0 : index
    %c0_3 = arith.constant 0 : index
    %5 = vector.load %arg1[%c0_2, %c0_3] : memref<8x1024xf32, #tpu.memory_space<vmem>>, vector<8x1024xf32>
    tpu.vector_store %arg1[%c0_2, %c0_3], %4 {strides = array<i32>} : memref<8x1024xf32, #tpu.memory_space<vmem>>, vector<8x1024xf32>,
    return
  }
}

</mosaic_0001>

<llo_original>
// kernel: branch_1_fun.1
$region0: #{branch_1_fun.1}
  #allocation0 [shape = 'u32[]', space=smem, size = 0x4, offset = 0x4, fixed_abs, tag = 'smem constant byte address 0x4 - core index']
  #allocation1 [shape = 'u32[144,128]{1,0:T(1,128)}', space=vmem, size = 0x12000, scoped, tag = 'internal scratch']
  %s0 = inlined_call_operand.vmem [shape: f32[8,1024], index: 0, kind: input, shape index: {}]
  %s1 = inlined_call_operand.hbm [shape: f32[8,1024], index: 1, kind: output, shape index: {}]
  %s2 = sld [smem:[#allocation0]]
  $region14: #{branch_1_fun.1} parent=0
    _
  %s4 = ssub.s32 1, %s2
  %s5 = scalar_select 0, %s4, %s2
  $region1: #{branch_1_fun.1} parent=0
    #allocation2 [shape = 'u8[32768]{0}', space=vmem, size = 0x8000, scoped, tag = 'output window, operand 0, single buffered']
    #allocation3 [shape = 's32[1]{0}', space=sflag, size = 0x4, scoped, tag = 'scoped memory for branch_1_fun.1']
    %6 = vsyncpa [#allocation3], 0
    // Predicated region
    $region2: #{branch_1_fun.1} parent=1 // pred_check
      _
    $region3: #{branch_1_fun.1} parent=1 // pred_check_branch
      %8 = sbr.rel (0) target = $region5
    $region4: #{branch_1_fun.1} parent=1 // pred_region
      _
    $region5: #{branch_1_fun.1} parent=1 // pred_fallthru
      _
    %v9 = vld [vmem:[%s0] sm:$0xff]
    %v10 = vld [vmem:[%s0 + $0x8] sm:$0xff]
    %v11 = vld [vmem:[%s0 + $0x10] sm:$0xff]
    %v12 = vld [vmem:[%s0 + $0x18] sm:$0xff]
    %v13 = vld [vmem:[%s0 + $0x20] sm:$0xff]
    %v14 = vld [vmem:[%s0 + $0x28] sm:$0xff]
    %v15 = vld [vmem:[%s0 + $0x30] sm:$0xff]
    %v16 = vld [vmem:[%s0 + $0x38] sm:$0xff]
    %v17 = vmul.f32 %v9, 0.8
    %v18 = vmul.f32 %v10, 0.8
    %v19 = vmul.f32 %v11, 0.8
    %v20 = vmul.f32 %v12, 0.8
    %v21 = vmul.f32 %v13, 0.8
    %v22 = vmul.f32 %v14, 0.8
    %v23 = vmul.f32 %v15, 0.8
    %v24 = vmul.f32 %v16, 0.8
    %v25 = vsub.f32 0.1, %v17
    %v26 = vsub.f32 0.1, %v18
    %v27 = vsub.f32 0.1, %v19
    %v28 = vsub.f32 0.1, %v20
    %v29 = vsub.f32 0.1, %v21
    %v30 = vsub.f32 0.1, %v22
    %v31 = vsub.f32 0.1, %v23
    %v32 = vsub.f32 0.1, %v24
    %33 = vst [vmem:[#allocation2] sm:$0xff] %v25
    %34 = vst [vmem:[#allocation2 + $0x8] sm:$0xff] %v26
    %35 = vst [vmem:[#allocation2 + $0x10] sm:$0xff] %v27
    %36 = vst [vmem:[#allocation2 + $0x18] sm:$0xff] %v28
    %37 = vst [vmem:[#allocation2 + $0x20] sm:$0xff] %v29
    %38 = vst [vmem:[#allocation2 + $0x28] sm:$0xff] %v30
    %39 = vst [vmem:[#allocation2 + $0x30] sm:$0xff] %v31
    %40 = vst [vmem:[#allocation2 + $0x38] sm:$0xff] %v32
    // Predicated region
    $region6: #{branch_1_fun.1} parent=1 // pred_check
      _
    $region7: #{branch_1_fun.1} parent=1 // pred_check_branch
      %42 = sbr.rel (0) target = $region9
    $region8: #{branch_1_fun.1} parent=1 // pred_region
      %s44 = ssub.s32 1024, 1024
      %45 = vsyncadd [#allocation3], %s44
      %s47 = sshll.u32 [#allocation2], 4
      %s48 = int_to_ptr.vmem [resolvable:$true] %s47
      %50 = dma.vmem_to_hbm [thread:$0]  %s48, 1024, %s1, [#allocation3]
    $region9: #{branch_1_fun.1} parent=1 // pred_fallthru
      _
    // Predicated region
    $region10: #{branch_1_fun.1} parent=1 // pred_check
      _
    $region11: #{branch_1_fun.1} parent=1 // pred_check_branch
      %52 = sbr.rel (0) target = $region13
    $region12: #{branch_1_fun.1} parent=1 // pred_region
      %53 = dma.done [#allocation3], 1024
    $region13: #{branch_1_fun.1} parent=1 // pred_fallthru
      _
    %54 = vsyncpa [#allocation3], 1

</llo_original>
